<compile_context>
chip_gen: v6e
topology: v6e:2x2x1
jax: 0.10.0
libtpu: 0.0.40
codegen_flags: <defaults>
</compile_context>

<pallas_src>
import functools

import jax
import jax.numpy as jnp
from jax.experimental import pallas as pl
from jax.experimental.pallas import tpu as pltpu


def _round_up(x, m):
    return ((x + m - 1) // m) * m


def _tpu_generation():
    """Returns (vmem_capacity_bytes, multi_tensorcore) with conservative fallbacks."""
    vmem = 64 * 1024 * 1024
    try:
        info = pltpu.get_tpu_info()
        vmem = int(getattr(info, "vmem_capacity_bytes", vmem))
    except Exception:
        pass
    # v7x: 64 MiB VMEM per TensorCore, 2 TCs/chip. v5e/v6e: 128 MiB, 1 TC.
    multi_tc = vmem <= 64 * 1024 * 1024
    return vmem, multi_tc


def _vmem_knobs():
    """(block_budget_bytes, vmem_limit_bytes, multi_tc), gated per chip generation."""
    vmem, multi_tc = _tpu_generation()
    if vmem >= 128 * 1024 * 1024:                      # v5e / v6e: big single blocks
        return 48 * 1024 * 1024, 96 * 1024 * 1024, multi_tc
    return 24 * 1024 * 1024, 48 * 1024 * 1024, multi_tc  # v7x / unknown: keep headroom


def _sublane_pack(dtype):
    # class axis is the sublane axis in the 2D layout; keep tiles packing-aligned
    return {4: 8, 2: 16, 1: 32}.get(jnp.dtype(dtype).itemsize, 8)


def _pick_class_tile(n_cls, per_class_bytes, budget_bytes, *, pack, multi_tc):
    tile = max(1, min(n_cls, budget_bytes // max(1, per_class_bytes)))
    if multi_tc and n_cls > 1:
        # even number of roughly-equal "parallel" steps so both TensorCores stay busy
        steps = max(2, pl.cdiv(n_cls, tile))
        if steps % 2:
            steps += 1
        tile = pl.cdiv(n_cls, steps)
    if tile < n_cls:
        tile = min(n_cls, _round_up(tile, pack))
    return int(tile)


# ---------------------------------------------------------------------------
# Kernel 1: faithful concat (same inputs as the module's registered buffers).
# Lane-dense 2D layout: one class per sublane row, tokens*dim on the lane axis.
# ---------------------------------------------------------------------------
def _prompt_concat_kernel(ctx_ref, prefix_ref, suffix_ref, out_ref):
    c_tile = out_ref.shape[0]
    dim = prefix_ref.shape[1]
    ctx_cols = ctx_ref.shape[1]          # n_ctx * dim
    suf_cols = suffix_ref.shape[1]       # suf_len * dim
    out_ref[:, 0:dim] = prefix_ref[...]
    out_ref[:, pl.ds(dim, ctx_cols)] = jnp.broadcast_to(ctx_ref[...], (c_tile, ctx_cols))
    out_ref[:, pl.ds(dim + ctx_cols, suf_cols)] = suffix_ref[...]


def prompt_learner_forward(ctx, token_prefix, token_suffix, *, class_tile=None):
    """Pallas equivalent of PromptLearner.forward() with class_token_position='end'."""
    n_cls, pre_len, dim = token_prefix.shape
    assert pre_len == 1
    n_ctx, ctx_dim = ctx.shape
    assert ctx_dim == dim
    suf_len = token_suffix.shape[1]
    seq = 1 + n_ctx + suf_len
    out_dtype = token_prefix.dtype
    itemsize = jnp.dtype(out_dtype).itemsize

    # Free contiguous reshapes into the lane-dense 2D layout; cast hoisted here.
    # NOTE: matches the PyTorch module only when ctx is stored in the model dtype.
    ctx2 = ctx.astype(out_dtype).reshape(1, n_ctx * dim)
    pre2 = token_prefix.reshape(n_cls, dim)
    suf2 = token_suffix.reshape(n_cls, suf_len * dim)

    budget, vmem_limit, multi_tc = _vmem_knobs()
    if class_tile is None:
        per_class = 2 * (1 + suf_len + seq) * dim * itemsize  # double-buffered blocks
        class_tile = _pick_class_tile(n_cls, per_class, budget,
                                      pack=_sublane_pack(out_dtype), multi_tc=multi_tc)
    class_tile = int(class_tile)

    bytes_accessed = (n_ctx * dim + n_cls * (1 + suf_len + seq) * dim) * itemsize

    out2 = pl.pallas_call(
        _prompt_concat_kernel,
        out_shape=jax.ShapeDtypeStruct((n_cls, seq * dim), out_dtype),
        grid=(pl.cdiv(n_cls, class_tile),),
        in_specs=[
            # shared learned context: same block reused at every grid step
            pl.BlockSpec((1, n_ctx * dim), lambda i: (0, 0)),
            # per-class-tile SOS / suffix column slabs
            pl.BlockSpec((class_tile, dim), lambda i: (i, 0)),
            pl.BlockSpec((class_tile, suf_len * dim), lambda i: (i, 0)),
        ],
        out_specs=pl.BlockSpec((class_tile, seq * dim), lambda i: (i, 0)),
        compiler_params=pltpu.CompilerParams(
            dimension_semantics=("parallel",),
            vmem_limit_bytes=vmem_limit,
        ),
        cost_estimate=pl.CostEstimate(flops=0, transcendentals=0,
                                      bytes_accessed=bytes_accessed),
    )(ctx2, pre2, suf2)
    return out2.reshape(n_cls, seq, dim)


# ---------------------------------------------------------------------------
# Kernel 2 (preferred path): aliased in-place update of the full prompt buffer.
# Reads only the SOS column slab, rewrites only the [0, (1+n_ctx)*dim) window.
# ---------------------------------------------------------------------------
def _ctx_window_kernel(ctx_ref, win_ref, out_ref, *, dim):
    c_tile = out_ref.shape[0]
    read_cols = win_ref.shape[1]
    ctx_cols = ctx_ref.shape[1]
    out_ref[:, 0:read_cols] = win_ref[...]
    out_ref[:, pl.ds(dim, ctx_cols)] = jnp.broadcast_to(ctx_ref[...], (c_tile, ctx_cols))


def prompt_learner_forward_inplace(ctx, prompt_buffer, n_ctx, *, class_tile=None):
    """Fast path: `prompt_buffer` is the full (n_cls, seq, dim) token embedding of the
    tokenized prompts (SOS + placeholder ctx tokens + class name/EOS).  The output is
    aliased to it; only the SOS column slab is read and only the columns covering
    [0, 1+n_ctx) tokens are rewritten — all other prefix/suffix bytes never leave HBM.
    The returned array equals concat([prefix, expand(ctx), suffix], axis=1).
    """
    n_cls, seq, dim = prompt_buffer.shape
    out_dtype = prompt_buffer.dtype
    itemsize = jnp.dtype(out_dtype).itemsize
    assert ctx.shape == (n_ctx, dim)
    assert seq >= 1 + n_ctx
    # NOTE: silently downcasts ctx if the embedding buffer is lower precision;
    # consistent with the PyTorch module when ctx is stored in the model dtype.
    ctx2 = ctx.astype(out_dtype).reshape(1, n_ctx * dim)
    buf2 = prompt_buffer.reshape(n_cls, seq * dim)

    total_cols = seq * dim
    write_cols = (1 + n_ctx) * dim
    if dim % 128 == 0:
        read_cols = dim              # only the SOS slab; ctx columns are overwritten
        out_cols = write_cols        # multiple of 128 since dim is
    else:
        # fall back to a 128-aligned carry-through window for unaligned dims
        out_cols = min(total_cols, _round_up(write_cols, 128))
        read_cols = out_cols

    budget, vmem_limit, multi_tc = _vmem_knobs()
    if class_tile is None:
        per_class = 2 * (read_cols + out_cols) * itemsize   # double-buffered in + out
        class_tile = _pick_class_tile(n_cls, per_class, budget,
                                      pack=_sublane_pack(out_dtype), multi_tc=multi_tc)
    class_tile = int(class_tile)

    bytes_accessed = (n_ctx * dim + n_cls * (read_cols + out_cols)) * itemsize

    out2 = pl.pallas_call(
        functools.partial(_ctx_window_kernel, dim=dim),
        out_shape=jax.ShapeDtypeStruct((n_cls, seq * dim), out_dtype),
        grid=(pl.cdiv(n_cls, class_tile),),
        in_specs=[
            pl.BlockSpec((1, n_ctx * dim), lambda i: (0, 0)),
            pl.BlockSpec((class_tile, read_cols), lambda i: (i, 0)),
        ],
        out_specs=pl.BlockSpec((class_tile, out_cols), lambda i: (i, 0)),
        input_output_aliases={1: 0},   # prompt_buffer aliases the output
        compiler_params=pltpu.CompilerParams(
            dimension_semantics=("parallel",),
            vmem_limit_bytes=vmem_limit,
        ),
        cost_estimate=pl.CostEstimate(flops=0, transcendentals=0,
                                      bytes_accessed=bytes_accessed),
    )(ctx2, buf2)
    return out2.reshape(n_cls, seq, dim)


if __name__ == "__main__":
    # CLIP-like geometry at reduced embedding width: 77-token context, n_ctx=16
    # (fixed by the module), small class count.
    n_cls, n_ctx, ctx_dim, seq = 10, 16, 128, 77
    suf_len = seq - 1 - n_ctx  # 60

    key = jax.random.PRNGKey(0)
    k_ctx, k_emb = jax.random.split(key)

    # nn.init.normal_(ctx_vectors, std=0.02)
    ctx = (0.02 * jax.random.normal(k_ctx, (n_ctx, ctx_dim))).astype(jnp.float32)

    # Synthetic clip_model.token_embedding(tokenized_prompts) result; the module
    # slices it into the registered prefix/suffix buffers.
    embedding = jax.random.normal(k_emb, (n_cls, seq, ctx_dim), dtype=jnp.float32)
    token_prefix = embedding[:, :1, :]           # SOS
    token_suffix = embedding[:, 1 + n_ctx:, :]   # class tokens + EOS + padding

    # Reference: the exact PyTorch concat semantics, in plain JAX.
    ref = jnp.concatenate(
        [token_prefix,
         jnp.broadcast_to(ctx[None, :, :], (n_cls, n_ctx, ctx_dim)),
         token_suffix],
        axis=1)

    # Path 1: faithful prefix / ctx / suffix concat kernel (class-tiled, 2D layout).
    prompts = jax.block_until_ready(
        prompt_learner_forward(ctx, token_prefix, token_suffix))
    assert prompts.shape == (n_cls, seq, ctx_dim)
    assert prompts.dtype == ref.dtype
    assert jnp.allclose(prompts, ref), "concat kernel does not match reference"

    # Same kernel with a non-dividing class tile (ragged last grid step).
    prompts_ragged = jax.block_until_ready(
        prompt_learner_forward(ctx, token_prefix, token_suffix, class_tile=8))
    assert jnp.allclose(prompts_ragged, ref), "ragged concat kernel mismatch"

    # Path 2 (preferred): aliased in-place update of the full prompt buffer
    # (reads only the SOS slab, rewrites only the ctx-covering column window).
    prompts2 = jax.block_until_ready(
        prompt_learner_forward_inplace(ctx, embedding, n_ctx))
    assert prompts2.shape == (n_cls, seq, ctx_dim)
    assert prompts2.dtype == ref.dtype
    assert jnp.allclose(prompts2, ref), "in-place kernel does not match reference"

    # In-place path with a non-dividing class tile as well.
    prompts2_ragged = jax.block_until_ready(
        prompt_learner_forward_inplace(ctx, embedding, n_ctx, class_tile=8))
    assert jnp.allclose(prompts2_ragged, ref), "ragged in-place kernel mismatch"

    print("KERNEL_OK")
</pallas_src>

<mosaic_0001>
module attributes {stable_mosaic.version = 11 : i64} {
  func.func @_prompt_concat_kernel(%arg0: i32, %arg1: memref<1x2048xf32, #tpu.memory_space<vmem>>, %arg2: memref<8x128xf32, #tpu.memory_space<vmem>>, %arg3: memref<8x7680xf32, #tpu.memory_space<vmem>>, %arg4: memref<8x9856xf32, #tpu.memory_space<vmem>>) attributes {dimension_semantics = [#tpu.dimension_semantics<parallel>], iteration_bounds = array<i64: 2>, scalar_prefetch = 0 : i64, scratch_operands = 0 : i64, tpu.core_type = #tpu.core_type<tc>, window_params = [{pipeline_mode = #tpu.pipeline_mode<synchronous>, transform_indices = @transform_0, window_bounds = array<i64: 1, 2048>}, {transform_indices = @transform_1, window_bounds = array<i64: 8, 128>}, {transform_indices = @transform_2, window_bounds = array<i64: 8, 7680>}, {transform_indices = @transform_3, window_bounds = array<i64: 8, 9856>}]} {
    %c0 = arith.constant 0 : index
    %c0_0 = arith.constant 0 : index
    %0 = vector.load %arg2[%c0, %c0_0] : memref<8x128xf32, #tpu.memory_space<vmem>>, vector<8x128xf32>
    %c0_1 = arith.constant 0 : index
    %c0_2 = arith.constant 0 : index
    %1 = vector.load %arg4[%c0_1, %c0_2] : memref<8x9856xf32, #tpu.memory_space<vmem>>, vector<8x128xf32>
    tpu.vector_store %arg4[%c0_1, %c0_2], %0 {strides = array<i32>} : memref<8x9856xf32, #tpu.memory_space<vmem>>, vector<8x128xf32>,
    %c0_3 = arith.constant 0 : index
    %c0_4 = arith.constant 0 : index
    %2 = vector.load %arg1[%c0_3, %c0_4] : memref<1x2048xf32, #tpu.memory_space<vmem>>, vector<1x2048xf32>
    %3 = vector.shape_cast %2 : vector<1x2048xf32> to vector<1x2048xf32>
    %4 = vector.broadcast %3 : vector<1x2048xf32> to vector<8x2048xf32>
    %c0_5 = arith.constant 0 : index
    %c128 = arith.constant 128 : index
    %5 = vector.load %arg4[%c0_5, %c128] : memref<8x9856xf32, #tpu.memory_space<vmem>>, vector<8x2048xf32>
    tpu.vector_store %arg4[%c0_5, %c128], %4 {strides = array<i32>} : memref<8x9856xf32, #tpu.memory_space<vmem>>, vector<8x2048xf32>,
    %c0_6 = arith.constant 0 : index
    %c0_7 = arith.constant 0 : index
    %6 = vector.load %arg3[%c0_6, %c0_7] : memref<8x7680xf32, #tpu.memory_space<vmem>>, vector<8x7680xf32>
    %c0_8 = arith.constant 0 : index
    %c2176 = arith.constant 2176 : index
    %7 = vector.load %arg4[%c0_8, %c2176] : memref<8x9856xf32, #tpu.memory_space<vmem>>, vector<8x7680xf32>
    tpu.vector_store %arg4[%c0_8, %c2176], %6 {strides = array<i32>} : memref<8x9856xf32, #tpu.memory_space<vmem>>, vector<8x7680xf32>,
    return
  }
  func.func @transform_0(%arg0: i32) -> (i32, i32) {
    %c0_i32 = arith.constant 0 : i32
    %c0_i32_0 = arith.constant 0 : i32
    %c0_i32_1 = arith.constant 0 : i32
    return %c0_i32, %c0_i32_0 : i32, i32
  }
  func.func @transform_1(%arg0: i32) -> (i32, i32) {
    %c0_i32 = arith.constant 0 : i32
    %c0_i32_0 = arith.constant 0 : i32
    return %arg0, %c0_i32 : i32, i32
  }
  func.func @transform_2(%arg0: i32) -> (i32, i32) {
    %c0_i32 = arith.constant 0 : i32
    %c0_i32_0 = arith.constant 0 : i32
    return %arg0, %c0_i32 : i32, i32
  }
  func.func @transform_3(%arg0: i32) -> (i32, i32) {
    %c0_i32 = arith.constant 0 : i32
    %c0_i32_0 = arith.constant 0 : i32
    return %arg0, %c0_i32 : i32, i32
  }
}

</mosaic_0001>

<llo_original>
// kernel: tpu_custom_call.1
$region0: #{tpu_custom_call.1}
  #allocation0 [shape = 'u32[]', space=smem, size = 0x4, offset = 0x4, fixed_abs, tag = 'smem constant byte address 0x4 - core index']
  #allocation1 [shape = 'u32[144,128]{1,0:T(1,128)}', space=vmem, size = 0x12000, scoped, tag = 'internal scratch']
  %s0 = inlined_call_operand.hbm [shape: f32[1,2048], index: 0, kind: input, shape index: {}]
  %s1 = inlined_call_operand.hbm [shape: f32[10,128], index: 1, kind: input, shape index: {}]
  %s2 = inlined_call_operand.hbm [shape: f32[10,7680], index: 2, kind: input, shape index: {}]
  %s3 = inlined_call_operand.hbm [shape: f32[10,9856], index: 3, kind: output, shape index: {}]
  %s4 = sld [smem:[#allocation0]]
  $region57: #{tpu_custom_call.1} parent=0
    _
  %s6 = ssub.s32 1, %s4
  %s7 = scalar_select 0, %s6, %s4
  $region1: #{tpu_custom_call.1} parent=0
    #allocation2 [shape = 'u8[8192]{0}', space=vmem, size = 0x2000, scoped, tag = 'input window, operand 0, single buffered']
    #allocation3 [shape = 's32[2]{0}', space=sflag, size = 0x8, scoped, tag = 'scoped memory for tpu_custom_call.1']
    #allocation4 [shape = 's32[2]{0}', space=sflag, size = 0x8, scoped, tag = 'scoped memory for tpu_custom_call.1']
    #allocation5 [shape = 'u8[8192]{0}', space=vmem, size = 0x2000, scoped, tag = 'input window, operand 1']
    #allocation6 [shape = 's32[2]{0}', space=sflag, size = 0x8, scoped, tag = 'scoped memory for tpu_custom_call.1']
    #allocation7 [shape = 'u8[491520]{0}', space=vmem, size = 0x78000, scoped, tag = 'input window, operand 2']
    #allocation8 [shape = 'u8[630784]{0}', space=vmem, size = 0x9a000, scoped, tag = 'output window, operand 0']
    %8 = vsyncpa [#allocation3], 0
    %9 = vsyncpa [#allocation6], 0
    %s10 = scalar_lea.sflag [#allocation6], 1
    %11 = vsyncpa %s10, 0
    %12 = vsyncpa [#allocation4], 0
    %s13 = scalar_lea.sflag [#allocation4], 1
    %14 = vsyncpa %s13, 0
    loop: start=0, step=1, limit=4
    $region2: #{tpu_custom_call.1} parent=1 // loop_pre_header
      _
    $region3: #{tpu_custom_call.1} parent=1 // loop_header
      %s16 = sphi 0, %s20
      %p17 = scmp.ge.s32.totalorder %s16, 4
      %s24 = sphi 0, %s24
      %s26 = sphi 0, %s24
      %s27 = sphi 0, %s26
      %s41 = sphi 0, %s27
      %s47 = sphi 0, %s49
      %s50 = sphi 0, %s47
      %s51 = sphi 0, %s50
      %s67 = sphi 0, %s51
      %s73 = sphi 0, %s75
      %s76 = sphi 0, %s73
      %s77 = sphi 0, %s76
      %s93 = sphi 0, %s77
      %s99 = sphi 0, %s101
      %s102 = sphi 0, %s99
      %s103 = sphi 0, %s102
      %s119 = sphi 0, %s103
    $region4: #{tpu_custom_call.1} parent=1 // loop_header_branch
      %19 = sbr.rel (%p17) target = $region8
    $region5: #{tpu_custom_call.1} parent=1 // loop_body
      %s21 = ssub.s32 %s16, 1
      %s22 = ssub.s32 %s16, 2
      %s23 = sadd.s32 %s16, 1
      %s25 = sadd.s32 %s24, 1
      %p28 = scmp.eq.s32.totalorder %s16, 1
      %p29 = scmp.ne.s32.totalorder %s24, %s26
      %p30 = scmp.eq.s32.totalorder %s16, 0
      %p31 = por %p29, %p30
      %p32 = scmp.ne.s32.totalorder %s24, %s26
      %p33 = scmp.eq.s32.totalorder %s21, 1
      %p34 = por %p32, %p33
      %p35 = scmp.ne.s32.totalorder %s26, %s27
      %p36 = scmp.eq.s32.totalorder %s21, 0
      %p37 = por %p35, %p36
      %p38 = scmp.ne.s32.totalorder %s26, %s27
      %p39 = scmp.eq.s32.totalorder %s22, 1
      %p40 = por %p38, %p39
      %p42 = scmp.ne.s32.totalorder %s27, %s41
      %p43 = scmp.eq.s32.totalorder %s22, 0
      %p44 = por %p42, %p43
      %s45 = ssub.s32 %s16, %s23
      %p46 = scmp.eq.s32.totalorder %s45, 0
      %s48 = sadd.s32 %s47, 1
      %s49 = scalar_select %p46, %s47, %s48
      %p52 = pneg %p46
      %p53 = scmp.eq.s32.totalorder %s16, 1
      %p54 = por %p52, %p53
      %p55 = scmp.ne.s32.totalorder %s47, %s50
      %p56 = scmp.eq.s32.totalorder %s16, 0
      %p57 = por %p55, %p56
      %p58 = scmp.ne.s32.totalorder %s47, %s50
      %p59 = scmp.eq.s32.totalorder %s21, 1
      %p60 = por %p58, %p59
      %p61 = scmp.ne.s32.totalorder %s50, %s51
      %p62 = scmp.eq.s32.totalorder %s21, 0
      %p63 = por %p61, %p62
      %p64 = scmp.ne.s32.totalorder %s50, %s51
      %p65 = scmp.eq.s32.totalorder %s22, 1
      %p66 = por %p64, %p65
      %p68 = scmp.ne.s32.totalorder %s51, %s67
      %p69 = scmp.eq.s32.totalorder %s22, 0
      %p70 = por %p68, %p69
      %s71 = ssub.s32 %s16, %s23
      %p72 = scmp.eq.s32.totalorder %s71, 0
      %s74 = sadd.s32 %s73, 1
      %s75 = scalar_select %p72, %s73, %s74
      %p78 = pneg %p72
      %p79 = scmp.eq.s32.totalorder %s16, 1
      %p80 = por %p78, %p79
      %p81 = scmp.ne.s32.totalorder %s73, %s76
      %p82 = scmp.eq.s32.totalorder %s16, 0
      %p83 = por %p81, %p82
      %p84 = scmp.ne.s32.totalorder %s73, %s76
      %p85 = scmp.eq.s32.totalorder %s21, 1
      %p86 = por %p84, %p85
      %p87 = scmp.ne.s32.totalorder %s76, %s77
      %p88 = scmp.eq.s32.totalorder %s21, 0
      %p89 = por %p87, %p88
      %p90 = scmp.ne.s32.totalorder %s76, %s77
      %p91 = scmp.eq.s32.totalorder %s22, 1
      %p92 = por %p90, %p91
      %p94 = scmp.ne.s32.totalorder %s77, %s93
      %p95 = scmp.eq.s32.totalorder %s22, 0
      %p96 = por %p94, %p95
      %s97 = ssub.s32 %s16, %s23
      %p98 = scmp.eq.s32.totalorder %s97, 0
      %s100 = sadd.s32 %s99, 1
      %s101 = scalar_select %p98, %s99, %s100
      %p104 = pneg %p98
      %p105 = scmp.eq.s32.totalorder %s16, 1
      %p106 = por %p104, %p105
      %p107 = scmp.ne.s32.totalorder %s99, %s102
      %p108 = scmp.eq.s32.totalorder %s16, 0
      %p109 = por %p107, %p108
      %p110 = scmp.ne.s32.totalorder %s99, %s102
      %p111 = scmp.eq.s32.totalorder %s21, 1
      %p112 = por %p110, %p111
      %p113 = scmp.ne.s32.totalorder %s102, %s103
      %p114 = scmp.eq.s32.totalorder %s21, 0
      %p115 = por %p113, %p114
      %p116 = scmp.ne.s32.totalorder %s102, %s103
      %p117 = scmp.eq.s32.totalorder %s22, 1
      %p118 = por %p116, %p117
      %p120 = scmp.ne.s32.totalorder %s103, %s119
      %p121 = scmp.eq.s32.totalorder %s22, 0
      %p122 = por %p120, %p121
      %p123 = scmp.le.s32.totalorder 1, %s16
      %p124 = scmp.lt.s32.totalorder %s16, 3
      %p125 = pnand %p123, %p124
      %p126 = pneg %p125
      // Predicated region
      $region9: #{tpu_custom_call.1} parent=5 // pred_check
        _
      $region10: #{tpu_custom_call.1} parent=5 // pred_check_branch
        %128 = sbr.rel (%p125) target = $region12
      $region11: #{tpu_custom_call.1} parent=5 // pred_region
        %s129 = ssub.s32 %s16, 1
        // Predicated region
        $region13: #{tpu_custom_call.1} parent=11 // pred_check
          %p130 = pneg %p37
        $region14: #{tpu_custom_call.1} parent=11 // pred_check_branch
          %132 = sbr.rel (%p130) target = $region16
        $region15: #{tpu_custom_call.1} parent=11 // pred_region
          %s134 = ssub.s32 256, 256
          %135 = vsyncadd [#allocation3], %s134
          %s137 = sshll.u32 [#allocation2], 4
          %s138 = int_to_ptr.vmem [resolvable:$true] %s137
          %140 = dma.hbm_to_vmem [thread:$0]  %s0, 256, %s138, [#allocation3]
        $region16: #{tpu_custom_call.1} parent=11 // pred_fallthru
          _
      $region12: #{tpu_custom_call.1} parent=5 // pred_fallthru
        _
      %p141 = scmp.lt.s32.totalorder %s16, 2
      // Predicated region
      $region17: #{tpu_custom_call.1} parent=5 // pred_check
        %p142 = pneg %p141
      $region18: #{tpu_custom_call.1} parent=5 // pred_check_branch
        %144 = sbr.rel (%p142) target = $region20
      $region19: #{tpu_custom_call.1} parent=5 // pred_region
        // Predicated region
        $region21: #{tpu_custom_call.1} parent=19 // pred_check
          %p145 = pneg %p57
        $region22: #{tpu_custom_call.1} parent=19 // pred_check_branch
          %147 = sbr.rel (%p145) target = $region24
        $region23: #{tpu_custom_call.1} parent=19 // pred_region
          %s148 = sand.u32 %s16, 1
          %s149 = scalar_lea.sflag [#allocation6], %s148
          %s150 = sand.u32 %s47, 1
          %s151 = smul.addr %s150, 8
          %s152 = scalar_lea.vmem [#allocation5], %s151
          %s154 = ssub.s32 128, 128
          %155 = vsyncadd %s149, %s154
          %s156 = smul.addr %s16, 128
          %s157 = scalar_lea.hbm %s1, %s156
          %s159 = sshll.u32 %s152, 4
          %s160 = int_to_ptr.vmem [resolvable:$true] %s159
          %162 = dma.hbm_to_vmem [thread:$0]  %s157, 128, %s160, %s149
        $region24: #{tpu_custom_call.1} parent=19 // pred_fallthru
          _
        // Predicated region
        $region25: #{tpu_custom_call.1} parent=19 // pred_check
          %p163 = pneg %p83
        $region26: #{tpu_custom_call.1} parent=19 // pred_check_branch
          %165 = sbr.rel (%p163) target = $region28
        $region27: #{tpu_custom_call.1} parent=19 // pred_region
          %s166 = sand.u32 %s16, 1
          %s167 = scalar_lea.sflag [#allocation6], %s166
          %s168 = sand.u32 %s73, 1
          %s169 = smul.addr %s168, 480
          %s170 = scalar_lea.vmem [#allocation7], %s169
          %s172 = ssub.s32 7680, 7680
          %173 = vsyncadd %s167, %s172
          %s174 = smul.addr %s16, 60
          %s175 = smul.addr %s174, 128
          %s176 = scalar_lea.hbm %s2, %s175
          %s178 = sshll.u32 %s170, 4
          %s179 = int_to_ptr.vmem [resolvable:$true] %s178
          %181 = dma.hbm_to_vmem [thread:$0]  %s176, 7680, %s179, %s167
        $region28: #{tpu_custom_call.1} parent=19 // pred_fallthru
          _
      $region20: #{tpu_custom_call.1} parent=5 // pred_fallthru
        _
      %p182 = scmp.le.s32.totalorder 1, %s16
      %p183 = scmp.lt.s32.totalorder %s16, 3
      %p184 = pnand %p182, %p183
      %p185 = pneg %p184
      // Predicated region
      $region29: #{tpu_custom_call.1} parent=5 // pred_check
        _
      $region30: #{tpu_custom_call.1} parent=5 // pred_check_branch
        %187 = sbr.rel (%p184) target = $region32
      $region31: #{tpu_custom_call.1} parent=5 // pred_region
        %s188 = ssub.s32 %s16, 1
        // Predicated region
        $region33: #{tpu_custom_call.1} parent=31 // pred_check
          %p189 = pneg %p37
        $region34: #{tpu_custom_call.1} parent=31 // pred_check_branch
          %191 = sbr.rel (%p189) target = $region36
        $region35: #{tpu_custom_call.1} parent=31 // pred_region
          %192 = dma.done [#allocation3], 256
        $region36: #{tpu_custom_call.1} parent=31 // pred_fallthru
          _
        %s193 = sand.u32 %s21, 1
        %s194 = scalar_lea.sflag [#allocation6], %s193
        %s195 = sand.u32 %s50, 1
        %s196 = smul.addr %s195, 8
        %s197 = scalar_lea.vmem [#allocation5], %s196
        // Predicated region
        $region37: #{tpu_custom_call.1} parent=31 // pred_check
          %p198 = pneg %p63
        $region38: #{tpu_custom_call.1} parent=31 // pred_check_branch
          %200 = sbr.rel (%p198) target = $region40
        $region39: #{tpu_custom_call.1} parent=31 // pred_region
          %201 = dma.done %s194, 128
        $region40: #{tpu_custom_call.1} parent=31 // pred_fallthru
          _
        %s202 = sand.u32 %s21, 1
        %s203 = scalar_lea.sflag [#allocation6], %s202
        %s204 = sand.u32 %s76, 1
        %s205 = smul.addr %s204, 480
        %s206 = scalar_lea.vmem [#allocation7], %s205
        // Predicated region
        $region41: #{tpu_custom_call.1} parent=31 // pred_check
          %p207 = pneg %p89
        $region42: #{tpu_custom_call.1} parent=31 // pred_check_branch
          %209 = sbr.rel (%p207) target = $region44
        $region43: #{tpu_custom_call.1} parent=31 // pred_region
          %210 = dma.done %s203, 7680
        $region44: #{tpu_custom_call.1} parent=31 // pred_fallthru
          _
        %p211 = pneg %p37
        %p212 = pneg %p34
        %s213 = sand.u32 %s21, 1
        %s214 = scalar_lea.sflag [#allocation6], %s213
        %s215 = sand.u32 %s50, 1
        %s216 = smul.addr %s215, 8
        %s217 = scalar_lea.vmem [#allocation5], %s216
        %p218 = pneg %p63
        %p219 = pneg %p60
        %s220 = sand.u32 %s21, 1
        %s221 = scalar_lea.sflag [#allocation6], %s220
        %s222 = sand.u32 %s76, 1
        %s223 = smul.addr %s222, 480
        %s224 = scalar_lea.vmem [#allocation7], %s223
        %p225 = pneg %p89
        %p226 = pneg %p86
        %p227 = pneg %p115
        %p228 = pneg %p112
        %s229 = sand.u32 %s102, 1
        %s230 = scalar_lea.sflag [#allocation4], %s229
        %s231 = sand.u32 %s102, 1
        %s232 = smul.addr %s231, 616
        %s233 = scalar_lea.vmem [#allocation8], %s232
        %v234 = vld [vmem:[%s197] sm:$0xff]
        %235 = vst [vmem:[%s233] sm:$0xff] %v234
        %v236 = vld [vmem:[#allocation2] sm:$0xff]
        %v237 = vld [vmem:[#allocation2 + $0x8] sm:$0xff]
        %v240 = vlaneseq
        %v241 = vshrl.u32 %v240, 7
        %v242 = vsub.s32 0, %v241
        %v243 = vrot.slane %v236, %v242
        %v244 = vlaneseq
        %v245 = vshrl.u32 %v244, 7
        %v246 = vsub.s32 1, %v245
        %v247 = vrot.slane %v236, %v246
        %v248 = vlaneseq
        %v249 = vshrl.u32 %v248, 7
        %v250 = vsub.s32 2, %v249
        %v251 = vrot.slane %v236, %v250
        %v252 = vlaneseq
        %v253 = vshrl.u32 %v252, 7
        %v254 = vsub.s32 3, %v253
        %v255 = vrot.slane %v236, %v254
        %v256 = vlaneseq
        %v257 = vshrl.u32 %v256, 7
        %v258 = vsub.s32 4, %v257
        %v259 = vrot.slane %v236, %v258
        %v260 = vlaneseq
        %v261 = vshrl.u32 %v260, 7
        %v262 = vsub.s32 5, %v261
        %v263 = vrot.slane %v236, %v262
        %v264 = vlaneseq
        %v265 = vshrl.u32 %v264, 7
        %v266 = vsub.s32 6, %v265
        %v267 = vrot.slane %v236, %v266
        %v268 = vlaneseq
        %v269 = vshrl.u32 %v268, 7
        %v270 = vsub.s32 7, %v269
        %v271 = vrot.slane %v236, %v270
        %v272 = vlaneseq
        %v273 = vshrl.u32 %v272, 7
        %v274 = vsub.s32 0, %v273
        %v275 = vrot.slane %v237, %v274
        %v276 = vlaneseq
        %v277 = vshrl.u32 %v276, 7
        %v278 = vsub.s32 1, %v277
        %v279 = vrot.slane %v237, %v278
        %v280 = vlaneseq
        %v281 = vshrl.u32 %v280, 7
        %v282 = vsub.s32 2, %v281
        %v283 = vrot.slane %v237, %v282
        %v284 = vlaneseq
        %v285 = vshrl.u32 %v284, 7
        %v286 = vsub.s32 3, %v285
        %v287 = vrot.slane %v237, %v286
        %v288 = vlaneseq
        %v289 = vshrl.u32 %v288, 7
        %v290 = vsub.s32 4, %v289
        %v291 = vrot.slane %v237, %v290
        %v292 = vlaneseq
        %v293 = vshrl.u32 %v292, 7
        %v294 = vsub.s32 5, %v293
        %v295 = vrot.slane %v237, %v294
        %v296 = vlaneseq
        %v297 = vshrl.u32 %v296, 7
        %v298 = vsub.s32 6, %v297
        %v299 = vrot.slane %v237, %v298
        %v300 = vlaneseq
        %v301 = vshrl.u32 %v300, 7
        %v302 = vsub.s32 7, %v301
        %v303 = vrot.slane %v237, %v302
        %320 = vst [vmem:[%s233 + $0x8] sm:$0xff] %v243
        %321 = vst [vmem:[%s233 + $0x10] sm:$0xff] %v247
        %322 = vst [vmem:[%s233 + $0x18] sm:$0xff] %v251
        %323 = vst [vmem:[%s233 + $0x20] sm:$0xff] %v255
        %324 = vst [vmem:[%s233 + $0x28] sm:$0xff] %v259
        %325 = vst [vmem:[%s233 + $0x30] sm:$0xff] %v263
        %326 = vst [vmem:[%s233 + $0x38] sm:$0xff] %v267
        %327 = vst [vmem:[%s233 + $0x40] sm:$0xff] %v271
        %328 = vst [vmem:[%s233 + $0x48] sm:$0xff] %v275
        %329 = vst [vmem:[%s233 + $0x50] sm:$0xff] %v279
        %330 = vst [vmem:[%s233 + $0x58] sm:$0xff] %v283
        %331 = vst [vmem:[%s233 + $0x60] sm:$0xff] %v287
        %332 = vst [vmem:[%s233 + $0x68] sm:$0xff] %v291
        %333 = vst [vmem:[%s233 + $0x70] sm:$0xff] %v295
        %334 = vst [vmem:[%s233 + $0x78] sm:$0xff] %v299
        %335 = vst [vmem:[%s233 + $0x80] sm:$0xff] %v303
        %v336 = vld [vmem:[%s206] sm:$0xff]
        %v337 = vld [vmem:[%s206 + $0x8] sm:$0xff]
        %v338 = vld [vmem:[%s206 + $0x10] sm:$0xff]
        %v339 = vld [vmem:[%s206 + $0x18] sm:$0xff]
        %v340 = vld [vmem:[%s206 + $0x20] sm:$0xff]
        %v341 = vld [vmem:[%s206 + $0x28] sm:$0xff]
        %v342 = vld [vmem:[%s206 + $0x30] sm:$0xff]
        %v343 = vld [vmem:[%s206 + $0x38] sm:$0xff]
        %v344 = vld [vmem:[%s206 + $0x40] sm:$0xff]
        %v345 = vld [vmem:[%s206 + $0x48] sm:$0xff]
        %v346 = vld [vmem:[%s206 + $0x50] sm:$0xff]
        %v347 = vld [vmem:[%s206 + $0x58] sm:$0xff]
        %v348 = vld [vmem:[%s206 + $0x60] sm:$0xff]
        %v349 = vld [vmem:[%s206 + $0x68] sm:$0xff]
        %v350 = vld [vmem:[%s206 + $0x70] sm:$0xff]
        %v351 = vld [vmem:[%s206 + $0x78] sm:$0xff]
        %v352 = vld [vmem:[%s206 + $0x80] sm:$0xff]
        %v353 = vld [vmem:[%s206 + $0x88] sm:$0xff]
        %v354 = vld [vmem:[%s206 + $0x90] sm:$0xff]
        %v355 = vld [vmem:[%s206 + $0x98] sm:$0xff]
        %v356 = vld [vmem:[%s206 + $0xa0] sm:$0xff]
        %v357 = vld [vmem:[%s206 + $0xa8] sm:$0xff]
        %v358 = vld [vmem:[%s206 + $0xb0] sm:$0xff]
        %v359 = vld [vmem:[%s206 + $0xb8] sm:$0xff]
        %v360 = vld [vmem:[%s206 + $0xc0] sm:$0xff]
        %v361 = vld [vmem:[%s206 + $0xc8] sm:$0xff]
        %v362 = vld [vmem:[%s206 + $0xd0] sm:$0xff]
        %v363 = vld [vmem:[%s206 + $0xd8] sm:$0xff]
        %v364 = vld [vmem:[%s206 + $0xe0] sm:$0xff]
        %v365 = vld [vmem:[%s206 + $0xe8] sm:$0xff]
        %v366 = vld [vmem:[%s206 + $0xf0] sm:$0xff]
        %v367 = vld [vmem:[%s206 + $0xf8] sm:$0xff]
        %v368 = vld [vmem:[%s206 + $0x100] sm:$0xff]
        %v369 = vld [vmem:[%s206 + $0x108] sm:$0xff]
        %v370 = vld [vmem:[%s206 + $0x110] sm:$0xff]
        %v371 = vld [vmem:[%s206 + $0x118] sm:$0xff]
        %v372 = vld [vmem:[%s206 + $0x120] sm:$0xff]
        %v373 = vld [vmem:[%s206 + $0x128] sm:$0xff]
        %v374 = vld [vmem:[%s206 + $0x130] sm:$0xff]
        %v375 = vld [vmem:[%s206 + $0x138] sm:$0xff]
        %v376 = vld [vmem:[%s206 + $0x140] sm:$0xff]
        %v377 = vld [vmem:[%s206 + $0x148] sm:$0xff]
        %v378 = vld [vmem:[%s206 + $0x150] sm:$0xff]
        %v379 = vld [vmem:[%s206 + $0x158] sm:$0xff]
        %v380 = vld [vmem:[%s206 + $0x160] sm:$0xff]
        %v381 = vld [vmem:[%s206 + $0x168] sm:$0xff]
        %v382 = vld [vmem:[%s206 + $0x170] sm:$0xff]
        %v383 = vld [vmem:[%s206 + $0x178] sm:$0xff]
        %v384 = vld [vmem:[%s206 + $0x180] sm:$0xff]
        %v385 = vld [vmem:[%s206 + $0x188] sm:$0xff]
        %v386 = vld [vmem:[%s206 + $0x190] sm:$0xff]
        %v387 = vld [vmem:[%s206 + $0x198] sm:$0xff]
        %v388 = vld [vmem:[%s206 + $0x1a0] sm:$0xff]
        %v389 = vld [vmem:[%s206 + $0x1a8] sm:$0xff]
        %v390 = vld [vmem:[%s206 + $0x1b0] sm:$0xff]
        %v391 = vld [vmem:[%s206 + $0x1b8] sm:$0xff]
        %v392 = vld [vmem:[%s206 + $0x1c0] sm:$0xff]
        %v393 = vld [vmem:[%s206 + $0x1c8] sm:$0xff]
        %v394 = vld [vmem:[%s206 + $0x1d0] sm:$0xff]
        %v395 = vld [vmem:[%s206 + $0x1d8] sm:$0xff]
        %396 = vst [vmem:[%s233 + $0x88] sm:$0xff] %v336
        %397 = vst [vmem:[%s233 + $0x90] sm:$0xff] %v337
        %398 = vst [vmem:[%s233 + $0x98] sm:$0xff] %v338
        %399 = vst [vmem:[%s233 + $0xa0] sm:$0xff] %v339
        %400 = vst [vmem:[%s233 + $0xa8] sm:$0xff] %v340
        %401 = vst [vmem:[%s233 + $0xb0] sm:$0xff] %v341
        %402 = vst [vmem:[%s233 + $0xb8] sm:$0xff] %v342
        %403 = vst [vmem:[%s233 + $0xc0] sm:$0xff] %v343
        %404 = vst [vmem:[%s233 + $0xc8] sm:$0xff] %v344
        %405 = vst [vmem:[%s233 + $0xd0] sm:$0xff] %v345
        %406 = vst [vmem:[%s233 + $0xd8] sm:$0xff] %v346
        %407 = vst [vmem:[%s233 + $0xe0] sm:$0xff] %v347
        %408 = vst [vmem:[%s233 + $0xe8] sm:$0xff] %v348
        %409 = vst [vmem:[%s233 + $0xf0] sm:$0xff] %v349
        %410 = vst [vmem:[%s233 + $0xf8] sm:$0xff] %v350
        %411 = vst [vmem:[%s233 + $0x100] sm:$0xff] %v351
        %412 = vst [vmem:[%s233 + $0x108] sm:$0xff] %v352
        %413 = vst [vmem:[%s233 + $0x110] sm:$0xff] %v353
        %414 = vst [vmem:[%s233 + $0x118] sm:$0xff] %v354
        %415 = vst [vmem:[%s233 + $0x120] sm:$0xff] %v355
        %416 = vst [vmem:[%s233 + $0x128] sm:$0xff] %v356
        %417 = vst [vmem:[%s233 + $0x130] sm:$0xff] %v357
        %418 = vst [vmem:[%s233 + $0x138] sm:$0xff] %v358
        %419 = vst [vmem:[%s233 + $0x140] sm:$0xff] %v359
        %420 = vst [vmem:[%s233 + $0x148] sm:$0xff] %v360
        %421 = vst [vmem:[%s233 + $0x150] sm:$0xff] %v361
        %422 = vst [vmem:[%s233 + $0x158] sm:$0xff] %v362
        %423 = vst [vmem:[%s233 + $0x160] sm:$0xff] %v363
        %424 = vst [vmem:[%s233 + $0x168] sm:$0xff] %v364
        %425 = vst [vmem:[%s233 + $0x170] sm:$0xff] %v365
        %426 = vst [vmem:[%s233 + $0x178] sm:$0xff] %v366
        %427 = vst [vmem:[%s233 + $0x180] sm:$0xff] %v367
        %428 = vst [vmem:[%s233 + $0x188] sm:$0xff] %v368
        %429 = vst [vmem:[%s233 + $0x190] sm:$0xff] %v369
        %430 = vst [vmem:[%s233 + $0x198] sm:$0xff] %v370
        %431 = vst [vmem:[%s233 + $0x1a0] sm:$0xff] %v371
        %432 = vst [vmem:[%s233 + $0x1a8] sm:$0xff] %v372
        %433 = vst [vmem:[%s233 + $0x1b0] sm:$0xff] %v373
        %434 = vst [vmem:[%s233 + $0x1b8] sm:$0xff] %v374
        %435 = vst [vmem:[%s233 + $0x1c0] sm:$0xff] %v375
        %436 = vst [vmem:[%s233 + $0x1c8] sm:$0xff] %v376
        %437 = vst [vmem:[%s233 + $0x1d0] sm:$0xff] %v377
        %438 = vst [vmem:[%s233 + $0x1d8] sm:$0xff] %v378
        %439 = vst [vmem:[%s233 + $0x1e0] sm:$0xff] %v379
        %440 = vst [vmem:[%s233 + $0x1e8] sm:$0xff] %v380
        %441 = vst [vmem:[%s233 + $0x1f0] sm:$0xff] %v381
        %442 = vst [vmem:[%s233 + $0x1f8] sm:$0xff] %v382
        %443 = vst [vmem:[%s233 + $0x200] sm:$0xff] %v383
        %444 = vst [vmem:[%s233 + $0x208] sm:$0xff] %v384
        %445 = vst [vmem:[%s233 + $0x210] sm:$0xff] %v385
        %446 = vst [vmem:[%s233 + $0x218] sm:$0xff] %v386
        %447 = vst [vmem:[%s233 + $0x220] sm:$0xff] %v387
        %448 = vst [vmem:[%s233 + $0x228] sm:$0xff] %v388
        %449 = vst [vmem:[%s233 + $0x230] sm:$0xff] %v389
        %450 = vst [vmem:[%s233 + $0x238] sm:$0xff] %v390
        %451 = vst [vmem:[%s233 + $0x240] sm:$0xff] %v391
        %452 = vst [vmem:[%s233 + $0x248] sm:$0xff] %v392
        %453 = vst [vmem:[%s233 + $0x250] sm:$0xff] %v393
        %454 = vst [vmem:[%s233 + $0x258] sm:$0xff] %v394
        %455 = vst [vmem:[%s233 + $0x260] sm:$0xff] %v395
        %s456 = sand.u32 %s102, 1
        %s457 = scalar_lea.sflag [#allocation4], %s456
        %s458 = sand.u32 %s102, 1
        %s459 = smul.addr %s458, 616
        %s460 = scalar_lea.vmem [#allocation8], %s459
        // Predicated region
        $region45: #{tpu_custom_call.1} parent=31 // pred_check
          %p461 = pneg %p112
        $region46: #{tpu_custom_call.1} parent=31 // pred_check_branch
          %463 = sbr.rel (%p461) target = $region48
        $region47: #{tpu_custom_call.1} parent=31 // pred_region
          %s465 = ssub.s32 9856, 9856
          %466 = vsyncadd %s457, %s465
          %s467 = smul.addr %s21, 77
          %s468 = smul.addr %s467, 128
          %s469 = scalar_lea.hbm %s3, %s468
          %s471 = sshll.u32 %s460, 4
          %s472 = int_to_ptr.vmem [resolvable:$true] %s471
          %474 = dma.vmem_to_hbm [thread:$0]  %s472, 9856, %s469, %s457
        $region48: #{tpu_custom_call.1} parent=31 // pred_fallthru
          _
      $region32: #{tpu_custom_call.1} parent=5 // pred_fallthru
        _
      %p475 = scmp.le.s32.totalorder 2, %s16
      // Predicated region
      $region49: #{tpu_custom_call.1} parent=5 // pred_check
        %p476 = pneg %p475
      $region50: #{tpu_custom_call.1} parent=5 // pred_check_branch
        %478 = sbr.rel (%p476) target = $region52
      $region51: #{tpu_custom_call.1} parent=5 // pred_region
        %s479 = ssub.s32 %s16, 2
        // Predicated region
        $region53: #{tpu_custom_call.1} parent=51 // pred_check
          %p480 = pneg %p118
        $region54: #{tpu_custom_call.1} parent=51 // pred_check_branch
          %482 = sbr.rel (%p480) target = $region56
        $region55: #{tpu_custom_call.1} parent=51 // pred_region
          %s483 = sand.u32 %s103, 1
          %s484 = scalar_lea.sflag [#allocation4], %s483
          %s485 = sand.u32 %s103, 1
          %s486 = smul.addr %s485, 616
          %s487 = scalar_lea.vmem [#allocation8], %s486
          %488 = dma.done %s484, 9856
        $region56: #{tpu_custom_call.1} parent=51 // pred_fallthru
          _
      $region52: #{tpu_custom_call.1} parent=5 // pred_fallthru
        _
    $region6: #{tpu_custom_call.1} parent=1 // loop_footer
      %s20 = sadd.s32 1, %s16
    $region7: #{tpu_custom_call.1} parent=1 // loop_footer_branch
      %15 = sbr.rel target = $region3
    $region8: #{tpu_custom_call.1} parent=1 // loop_exit
      _
    %489 = vsyncpa [#allocation3], 1
    %s490 = scalar_lea.sflag [#allocation3], 1
    %491 = vsyncpa %s490, 1
    %492 = vsyncpa [#allocation6], 1
    %s493 = scalar_lea.sflag [#allocation6], 1
    %494 = vsyncpa %s493, 1
    %495 = vsyncpa [#allocation4], 1
    %s496 = scalar_lea.sflag [#allocation4], 1
    %497 = vsyncpa %s496, 1

</llo_original>
